<compile_context>
chip_gen: v7x
topology: tpu7x:2x2x1
jax: 0.10.0
libtpu: 0.0.40
codegen_flags: <defaults>
</compile_context>

<pallas_src>
import jax
import jax.numpy as jnp
import numpy as np
from jax.experimental import pallas as pl
from jax.experimental.pallas import tpu as pltpu

EPS = 1e-8
_LANE = 128
_STATS = 8                      # [S_gt, Q_gt, S_d, Q_d, c_gt, c_d, 0, 0]
_TARGET_BLOCK_ELEMS = 512 * 1024  # ~2 MiB f32 per input block (roofline plateau)
_VMEM_LIMIT_BYTES = 48 * 1024 * 1024


def _cdiv(a: int, b: int) -> int:
    return -(-a // b)


def _round_up(x: int, m: int) -> int:
    return ((x + m - 1) // m) * m


def _round_down(x: int, m: int) -> int:
    return (x // m) * m


def _sublane_pack(dtype) -> int:
    """Native sublane packing for the dtype (8 for 4B, 16 for 2B, 32 for 1B)."""
    return {1: 32, 2: 16, 4: 8}.get(jnp.dtype(dtype).itemsize, 8)


def _pick_tiles(N, T, sub, block_n, block_t):
    """Moderate tiles: <= _TARGET_BLOCK_ELEMS per block, >=2 row tiles when
    N allows (v7x megacore), aiming for ~8 total grid steps."""
    if block_t is None:
        if T * sub <= _TARGET_BLOCK_ELEMS:
            block_t = T                                   # full rows, no T padding
        else:
            bt = _round_down(_TARGET_BLOCK_ELEMS // sub, _LANE)
            block_t = int(min(4096, max(_LANE, bt)))
    t_pad = T if block_t == T else _round_up(T, block_t)
    t_tiles = t_pad // block_t

    if block_n is None:
        rows_by_elems = max(sub, _round_down(_TARGET_BLOCK_ELEMS // block_t, sub))
        row_tiles_target = max(2, _cdiv(8, t_tiles))
        rows_for_steps = sub * _cdiv(_cdiv(N, sub), row_tiles_target)
        block_n = int(max(sub, min(rows_by_elems, rows_for_steps)))
    n_pad = _round_up(N, block_n)
    return block_n, block_t, n_pad, t_pad


def _neg_snr_stats_kernel(est_ref, gt_ref, out_ref):
    """One (block_n, block_t) tile per step.

    Grid = (row tiles [parallel], time tiles [arbitrary, innermost]).
    Per-row running statistics accumulate directly into the output block
    (resident in VMEM across the time axis); columns are
      0: sum(gt - c_gt)   1: sum((gt - c_gt)^2)
      2: sum(d  - c_d )   3: sum((d  - c_d )^2)      (d = est - gt)
      4: c_gt             5: c_d   (per-row shift from the first time tile)
    Finalization (padding correction, energies, log10, mean) is in the wrapper.
    """
    t = pl.program_id(1)
    bt = gt_ref.shape[-1]

    gt = gt_ref[...].astype(jnp.float32)
    d = est_ref[...].astype(jnp.float32) - gt

    @pl.when(t == 0)
    def _():
        out_ref[...] = jnp.zeros_like(out_ref)
        out_ref[:, 4:5] = jnp.sum(gt, axis=1, keepdims=True) * (1.0 / bt)
        out_ref[:, 5:6] = jnp.sum(d, axis=1, keepdims=True) * (1.0 / bt)

    c_gt = out_ref[:, 4:5]
    c_d = out_ref[:, 5:6]
    y_gt = gt - c_gt
    y_d = d - c_d

    out_ref[:, 0:1] += jnp.sum(y_gt, axis=1, keepdims=True)
    out_ref[:, 1:2] += jnp.sum(y_gt * y_gt, axis=1, keepdims=True)
    out_ref[:, 2:3] += jnp.sum(y_d, axis=1, keepdims=True)
    out_ref[:, 3:4] += jnp.sum(y_d * y_d, axis=1, keepdims=True)


def neg_snr_loss(est: jax.Array, gt: jax.Array, *,
                 block_n: int | None = None,
                 block_t: int | None = None) -> jax.Array:
    """est, gt: (B, C, T) -> scalar mean negative SNR (dB)."""
    assert est.shape == gt.shape and est.ndim == 3
    B, C, T = est.shape
    N = B * C
    est2 = est.reshape(N, T)
    gt2 = gt.reshape(N, T)

    sub = _sublane_pack(est2.dtype)
    block_n, block_t, n_pad, t_pad = _pick_tiles(N, T, sub, block_n, block_t)

    if (n_pad, t_pad) != (N, T):
        est2 = jnp.pad(est2, ((0, n_pad - N), (0, t_pad - T)))
        gt2 = jnp.pad(gt2, ((0, n_pad - N), (0, t_pad - T)))

    grid = (n_pad // block_n, t_pad // block_t)

    stats = pl.pallas_call(
        _neg_snr_stats_kernel,
        out_shape=jax.ShapeDtypeStruct((n_pad, _STATS), jnp.float32),
        grid_spec=pltpu.PrefetchScalarGridSpec(
            num_scalar_prefetch=0,
            grid=grid,
            in_specs=[
                pl.BlockSpec((block_n, block_t), lambda i, t: (i, t)),
                pl.BlockSpec((block_n, block_t), lambda i, t: (i, t)),
            ],
            out_specs=pl.BlockSpec((block_n, _STATS), lambda i, t: (i, 0)),
        ),
        compiler_params=pltpu.CompilerParams(
            dimension_semantics=("parallel", "arbitrary"),
            vmem_limit_bytes=_VMEM_LIMIT_BYTES,
        ),
    )(est2, gt2)

    st = stats[:N]
    s_sum, s_q = st[:, 0], st[:, 1]
    d_sum, d_q = st[:, 2], st[:, 3]
    c_gt, c_d = st[:, 4], st[:, 5]

    # Remove contributions of zero-padded time samples: each contributes
    # (0 - c) to the shifted sum and (0 - c)^2 to the shifted sum of squares.
    pad_t = jnp.float32(t_pad - T)
    s_sum = s_sum + pad_t * c_gt
    s_q = s_q - pad_t * c_gt * c_gt
    d_sum = d_sum + pad_t * c_d
    d_q = d_q - pad_t * c_d * c_d

    inv_t = jnp.float32(1.0 / T)
    s_energy = jnp.maximum(s_q - s_sum * s_sum * inv_t, 0.0)   # sum(gt_zm^2)
    n_energy = jnp.maximum(d_q - d_sum * d_sum * inv_t, 0.0)   # sum(e^2)
    snr_db = 10.0 * jnp.log10(s_energy / (n_energy + EPS) + EPS)
    return jnp.mean(-snr_db)


def _reference(est, gt):
    B, C, T = est.shape
    est = est.reshape(-1, T).astype(jnp.float32)
    gt = gt.reshape(-1, T).astype(jnp.float32)
    est = est - jnp.mean(est, axis=1, keepdims=True)
    gt = gt - jnp.mean(gt, axis=1, keepdims=True)
    e = est - gt
    losses = jnp.sum(gt * gt, axis=1) / (jnp.sum(e * e, axis=1) + EPS)
    losses = 10.0 * jnp.log10(losses + EPS)
    return jnp.mean(-losses)


if __name__ == "__main__":
    key = jax.random.PRNGKey(0)

    # --- test 1: small shape, single-tile fast path -------------------------
    k1, k2 = jax.random.split(key)
    B, C, T = 2, 4, 16
    gt = jax.random.normal(k1, (B, C, T), dtype=jnp.float32)
    est = gt + 0.1 * jax.random.normal(k2, (B, C, T), dtype=jnp.float32)

    loss = neg_snr_loss(est, gt)
    jax.block_until_ready(loss)
    ref = _reference(est, gt)
    assert np.allclose(np.asarray(loss), np.asarray(ref), rtol=1e-4, atol=2e-4), (
        loss, ref)

    # --- test 2: force the T-tiled / padded path (N=3 -> 8 rows, T=200 -> 256)
    k3, k4 = jax.random.split(k2)
    B2, C2, T2 = 1, 3, 200
    gt2 = jax.random.normal(k3, (B2, C2, T2), dtype=jnp.float32)
    est2 = gt2 + 0.2 * jax.random.normal(k4, (B2, C2, T2), dtype=jnp.float32)

    loss2 = neg_snr_loss(est2, gt2, block_n=8, block_t=128)
    jax.block_until_ready(loss2)
    ref2 = _reference(est2, gt2)
    assert np.allclose(np.asarray(loss2), np.asarray(ref2), rtol=1e-4, atol=2e-4), (
        loss2, ref2)

    # --- test 3: DC-offset signal on the tiled+padded path (cancellation check)
    k5, k6 = jax.random.split(k4)
    B3, C3, T3 = 2, 2, 300
    gt3 = 3.0 + jax.random.normal(k5, (B3, C3, T3), dtype=jnp.float32)
    est3 = gt3 + 0.1 * jax.random.normal(k6, (B3, C3, T3), dtype=jnp.float32)

    loss3 = neg_snr_loss(est3, gt3, block_n=8, block_t=128)
    jax.block_until_ready(loss3)
    ref3 = _reference(est3, gt3)
    assert np.allclose(np.asarray(loss3), np.asarray(ref3), rtol=1e-4, atol=2e-4), (
        loss3, ref3)

    print("KERNEL_OK")
</pallas_src>

<mosaic_0001>
module attributes {stable_mosaic.version = 11 : i64} {
  func.func @_neg_snr_stats_kernel(%arg0: i32, %arg1: i32, %arg2: memref<8x16xf32, #tpu.memory_space<vmem>>, %arg3: memref<8x16xf32, #tpu.memory_space<vmem>>, %arg4: memref<8x8xf32, #tpu.memory_space<vmem>>) attributes {dimension_semantics = [#tpu.dimension_semantics<parallel>, #tpu.dimension_semantics<arbitrary>], iteration_bounds = array<i64: 1, 1>, scalar_prefetch = 0 : i64, scratch_operands = 0 : i64, tpu.core_type = #tpu.core_type<tc>, window_params = [{transform_indices = @transform_0, window_bounds = array<i64: 8, 16>}, {transform_indices = @transform_1, window_bounds = array<i64: 8, 16>}, {transform_indices = @transform_2, window_bounds = array<i64: 8, 8>}]} {
    %c0 = arith.constant 0 : index
    %c0_0 = arith.constant 0 : index
    %0 = vector.load %arg3[%c0, %c0_0] : memref<8x16xf32, #tpu.memory_space<vmem>>, vector<8x16xf32>
    %c0_1 = arith.constant 0 : index
    %c0_2 = arith.constant 0 : index
    %1 = vector.load %arg2[%c0_1, %c0_2] : memref<8x16xf32, #tpu.memory_space<vmem>>, vector<8x16xf32>
    %2 = arith.subf %1, %0 : vector<8x16xf32>
    %c0_i32 = arith.constant 0 : i32
    %3 = arith.cmpi eq, %arg1, %c0_i32 : i32
    %4 = arith.extui %3 : i1 to i32
    %c0_i32_3 = arith.constant 0 : i32
    %5 = arith.cmpi ne, %4, %c0_i32_3 : i32
    scf.if %5 {
      %cst_22 = arith.constant 0.000000e+00 : f32
      %34 = vector.broadcast %cst_22 : f32 to vector<8x8xf32>
      %c0_23 = arith.constant 0 : index
      %c0_24 = arith.constant 0 : index
      %35 = vector.load %arg4[%c0_23, %c0_24] : memref<8x8xf32, #tpu.memory_space<vmem>>, vector<8x8xf32>
      tpu.vector_store %arg4[%c0_23, %c0_24], %34 {strides = array<i32>} : memref<8x8xf32, #tpu.memory_space<vmem>>, vector<8x8xf32>,
      %cst_25 = arith.constant dense<0.000000e+00> : vector<8xf32>
      %36 = vector.multi_reduction <add>, %0, %cst_25 [1] : vector<8x16xf32> to vector<8xf32>
      %37 = vector.shape_cast %36 : vector<8xf32> to vector<8x1xf32>
      %cst_26 = arith.constant 6.250000e-02 : f32
      %38 = vector.broadcast %cst_26 : f32 to vector<8x1xf32>
      %39 = arith.mulf %37, %38 : vector<8x1xf32>
      %c0_27 = arith.constant 0 : index
      %c4_28 = arith.constant 4 : index
      %40 = vector.load %arg4[%c0_27, %c4_28] : memref<8x8xf32, #tpu.memory_space<vmem>>, vector<8x1xf32>
      tpu.vector_store %arg4[%c0_27, %c4_28], %39 {strides = array<i32>} : memref<8x8xf32, #tpu.memory_space<vmem>>, vector<8x1xf32>,
      %cst_29 = arith.constant dense<0.000000e+00> : vector<8xf32>
      %41 = vector.multi_reduction <add>, %2, %cst_29 [1] : vector<8x16xf32> to vector<8xf32>
      %42 = vector.shape_cast %41 : vector<8xf32> to vector<8x1xf32>
      %cst_30 = arith.constant 6.250000e-02 : f32
      %43 = vector.broadcast %cst_30 : f32 to vector<8x1xf32>
      %44 = arith.mulf %42, %43 : vector<8x1xf32>
      %c0_31 = arith.constant 0 : index
      %c5_32 = arith.constant 5 : index
      %45 = vector.load %arg4[%c0_31, %c5_32] : memref<8x8xf32, #tpu.memory_space<vmem>>, vector<8x1xf32>
      tpu.vector_store %arg4[%c0_31, %c5_32], %44 {strides = array<i32>} : memref<8x8xf32, #tpu.memory_space<vmem>>, vector<8x1xf32>,
    } else {
    }
    %c0_4 = arith.constant 0 : index
    %c4 = arith.constant 4 : index
    %6 = vector.load %arg4[%c0_4, %c4] : memref<8x8xf32, #tpu.memory_space<vmem>>, vector<8x1xf32>
    %c0_5 = arith.constant 0 : index
    %c5 = arith.constant 5 : index
    %7 = vector.load %arg4[%c0_5, %c5] : memref<8x8xf32, #tpu.memory_space<vmem>>, vector<8x1xf32>
    %8 = vector.broadcast %6 : vector<8x1xf32> to vector<8x16xf32>
    %9 = arith.subf %0, %8 : vector<8x16xf32>
    %10 = vector.broadcast %7 : vector<8x1xf32> to vector<8x16xf32>
    %11 = arith.subf %2, %10 : vector<8x16xf32>
    %c0_6 = arith.constant 0 : index
    %c0_7 = arith.constant 0 : index
    %12 = vector.load %arg4[%c0_6, %c0_7] : memref<8x8xf32, #tpu.memory_space<vmem>>, vector<8x1xf32>
    %cst = arith.constant dense<0.000000e+00> : vector<8xf32>
    %13 = vector.multi_reduction <add>, %9, %cst [1] : vector<8x16xf32> to vector<8xf32>
    %14 = vector.shape_cast %13 : vector<8xf32> to vector<8x1xf32>
    %15 = arith.addf %12, %14 : vector<8x1xf32>
    %c0_8 = arith.constant 0 : index
    %c0_9 = arith.constant 0 : index
    %16 = vector.load %arg4[%c0_8, %c0_9] : memref<8x8xf32, #tpu.memory_space<vmem>>, vector<8x1xf32>
    tpu.vector_store %arg4[%c0_8, %c0_9], %15 {strides = array<i32>} : memref<8x8xf32, #tpu.memory_space<vmem>>, vector<8x1xf32>,
    %c0_10 = arith.constant 0 : index
    %c1 = arith.constant 1 : index
    %17 = vector.load %arg4[%c0_10, %c1] : memref<8x8xf32, #tpu.memory_space<vmem>>, vector<8x1xf32>
    %18 = arith.mulf %9, %9 : vector<8x16xf32>
    %cst_11 = arith.constant dense<0.000000e+00> : vector<8xf32>
    %19 = vector.multi_reduction <add>, %18, %cst_11 [1] : vector<8x16xf32> to vector<8xf32>
    %20 = vector.shape_cast %19 : vector<8xf32> to vector<8x1xf32>
    %21 = arith.addf %17, %20 : vector<8x1xf32>
    %c0_12 = arith.constant 0 : index
    %c1_13 = arith.constant 1 : index
    %22 = vector.load %arg4[%c0_12, %c1_13] : memref<8x8xf32, #tpu.memory_space<vmem>>, vector<8x1xf32>
    tpu.vector_store %arg4[%c0_12, %c1_13], %21 {strides = array<i32>} : memref<8x8xf32, #tpu.memory_space<vmem>>, vector<8x1xf32>,
    %c0_14 = arith.constant 0 : index
    %c2 = arith.constant 2 : index
    %23 = vector.load %arg4[%c0_14, %c2] : memref<8x8xf32, #tpu.memory_space<vmem>>, vector<8x1xf32>
    %cst_15 = arith.constant dense<0.000000e+00> : vector<8xf32>
    %24 = vector.multi_reduction <add>, %11, %cst_15 [1] : vector<8x16xf32> to vector<8xf32>
    %25 = vector.shape_cast %24 : vector<8xf32> to vector<8x1xf32>
    %26 = arith.addf %23, %25 : vector<8x1xf32>
    %c0_16 = arith.constant 0 : index
    %c2_17 = arith.constant 2 : index
    %27 = vector.load %arg4[%c0_16, %c2_17] : memref<8x8xf32, #tpu.memory_space<vmem>>, vector<8x1xf32>
    tpu.vector_store %arg4[%c0_16, %c2_17], %26 {strides = array<i32>} : memref<8x8xf32, #tpu.memory_space<vmem>>, vector<8x1xf32>,
    %c0_18 = arith.constant 0 : index
    %c3 = arith.constant 3 : index
    %28 = vector.load %arg4[%c0_18, %c3] : memref<8x8xf32, #tpu.memory_space<vmem>>, vector<8x1xf32>
    %29 = arith.mulf %11, %11 : vector<8x16xf32>
    %cst_19 = arith.constant dense<0.000000e+00> : vector<8xf32>
    %30 = vector.multi_reduction <add>, %29, %cst_19 [1] : vector<8x16xf32> to vector<8xf32>
    %31 = vector.shape_cast %30 : vector<8xf32> to vector<8x1xf32>
    %32 = arith.addf %28, %31 : vector<8x1xf32>
    %c0_20 = arith.constant 0 : index
    %c3_21 = arith.constant 3 : index
    %33 = vector.load %arg4[%c0_20, %c3_21] : memref<8x8xf32, #tpu.memory_space<vmem>>, vector<8x1xf32>
    tpu.vector_store %arg4[%c0_20, %c3_21], %32 {strides = array<i32>} : memref<8x8xf32, #tpu.memory_space<vmem>>, vector<8x1xf32>,
    return
  }
  func.func @transform_0(%arg0: i32, %arg1: i32) -> (i32, i32) {
    %c0_i32 = arith.constant 0 : i32
    return %arg0, %arg1 : i32, i32
  }
  func.func @transform_1(%arg0: i32, %arg1: i32) -> (i32, i32) {
    %c0_i32 = arith.constant 0 : i32
    return %arg0, %arg1 : i32, i32
  }
  func.func @transform_2(%arg0: i32, %arg1: i32) -> (i32, i32) {
    %c0_i32 = arith.constant 0 : i32
    %c0_i32_0 = arith.constant 0 : i32
    return %arg0, %c0_i32 : i32, i32
  }
}

</mosaic_0001>

<llo_original>
// kernel: tpu_custom_call.1
$region0: #{tpu_custom_call.1}
  #allocation0 [shape = 'u32[]', space=smem, size = 0x4, offset = 0x4, fixed_abs, tag = 'smem constant byte address 0x4 - core index']
  #allocation1 [shape = 'u32[144,128]{1,0:T(1,128)}', space=vmem, size = 0x12000, scoped, tag = 'internal scratch']
  %s0 = inlined_call_operand.hbm [shape: f32[8,16], index: 0, kind: input, shape index: {}]
  %s1 = inlined_call_operand.hbm [shape: f32[8,16], index: 1, kind: input, shape index: {}]
  %s2 = inlined_call_operand.hbm [shape: f32[8,8], index: 2, kind: output, shape index: {}]
  %s3 = sld [smem:[#allocation0]]
  $region30: #{tpu_custom_call.1} parent=0
    _
  %s5 = ssub.s32 1, %s3
  %s6 = scalar_select 0, %s5, %s3
  $region1: #{tpu_custom_call.1} parent=0
    #allocation2 [shape = 'u8[4096]{0}', space=vmem, size = 0x1000, scoped, tag = 'input window, operand 0, single buffered']
    #allocation3 [shape = 's32[1]{0}', space=sflag, size = 0x4, scoped, tag = 'scoped memory for tpu_custom_call.1']
    #allocation4 [shape = 's32[1]{0}', space=sflag, size = 0x4, scoped, tag = 'scoped memory for tpu_custom_call.1']
    #allocation5 [shape = 'u8[4096]{0}', space=vmem, size = 0x1000, scoped, tag = 'input window, operand 1, single buffered']
    #allocation6 [shape = 's32[1]{0}', space=sflag, size = 0x4, scoped, tag = 'scoped memory for tpu_custom_call.1']
    #allocation7 [shape = 'u8[4096]{0}', space=vmem, size = 0x1000, scoped, tag = 'output window, operand 0, single buffered']
    %7 = vsyncpa [#allocation3], 0
    %8 = vsyncpa [#allocation6], 0
    %9 = vsyncpa [#allocation4], 0
    // Predicated region
    $region2: #{tpu_custom_call.1} parent=1 // pred_check
      _
    $region3: #{tpu_custom_call.1} parent=1 // pred_check_branch
      %11 = sbr.rel (0) target = $region5
    $region4: #{tpu_custom_call.1} parent=1 // pred_region
      %s13 = ssub.s32 128, 128
      %14 = vsyncadd [#allocation3], %s13
      %s16 = sshll.u32 [#allocation2], 4
      %s17 = int_to_ptr.vmem [resolvable:$true] %s16
      %19 = dma.hbm_to_vmem [thread:$0]  %s0, 128, %s17, [#allocation3]
    $region5: #{tpu_custom_call.1} parent=1 // pred_fallthru
      _
    // Predicated region
    $region6: #{tpu_custom_call.1} parent=1 // pred_check
      _
    $region7: #{tpu_custom_call.1} parent=1 // pred_check_branch
      %21 = sbr.rel (0) target = $region9
    $region8: #{tpu_custom_call.1} parent=1 // pred_region
      %s23 = ssub.s32 128, 128
      %24 = vsyncadd [#allocation6], %s23
      %s26 = sshll.u32 [#allocation5], 4
      %s27 = int_to_ptr.vmem [resolvable:$true] %s26
      %29 = dma.hbm_to_vmem [thread:$0]  %s1, 128, %s27, [#allocation6]
    $region9: #{tpu_custom_call.1} parent=1 // pred_fallthru
      _
    // Predicated region
    $region10: #{tpu_custom_call.1} parent=1 // pred_check
      _
    $region11: #{tpu_custom_call.1} parent=1 // pred_check_branch
      %31 = sbr.rel (0) target = $region13
    $region12: #{tpu_custom_call.1} parent=1 // pred_region
      %32 = dma.done [#allocation3], 128
    $region13: #{tpu_custom_call.1} parent=1 // pred_fallthru
      _
    // Predicated region
    $region14: #{tpu_custom_call.1} parent=1 // pred_check
      _
    $region15: #{tpu_custom_call.1} parent=1 // pred_check_branch
      %34 = sbr.rel (0) target = $region17
    $region16: #{tpu_custom_call.1} parent=1 // pred_region
      %35 = dma.done [#allocation6], 128
    $region17: #{tpu_custom_call.1} parent=1 // pred_fallthru
      _
    %v36 = vld [vmem:[#allocation5] sm:$0xff]
    %v37 = vld [vmem:[#allocation2] sm:$0xff]
    %v38 = vsub.f32 %v37, %v36
    %p39 = scmp.eq.s32.totalorder 0, 0
    // Predicated region
    $region18: #{tpu_custom_call.1} parent=1 // pred_check
      %p40 = pneg %p39
    $region19: #{tpu_custom_call.1} parent=1 // pred_check_branch
      %42 = sbr.rel (%p40) target = $region21
    $region20: #{tpu_custom_call.1} parent=1 // pred_region
      %vm43 = vcmask 64512
      %44 = vst.msk [vmem:[#allocation7] sm:$0xff] %vm43, 0.0
      %vm45 = vcmask 130048
      %v46 = vsel %vm45, %v36, 0.0
      %47 = vadd.xlane.f32.xlu0 %v46
      %v48 = vpop.xlane.xlu0 %47
      %v49 = vmul.f32 %v48, 0.0625
      %vm50 = vcmask 39968
      %51 = vst.msk [vmem:[#allocation7] sm:$0xff] %vm50, %v49
      %v52 = vsel %vm45, %v38, 0.0
      %53 = vadd.xlane.f32.xlu0 %v52
      %v54 = vpop.xlane.xlu0 %53
      %v55 = vmul.f32 %v54, 0.0625
      %vm56 = vcmask 48168
      %57 = vst.msk [vmem:[#allocation7] sm:$0xff] %vm56, %v55
    $region21: #{tpu_custom_call.1} parent=1 // pred_fallthru
      _
    %v58 = vld [vmem:[#allocation7] sm:$0xff]
    %60 = vset.pattern.permute.xlu0 4
    %61 = vperm.xlu0 %60, %v58
    %v62 = vpop.permute.xlu0 %61
    %v64 = vsub.f32 %v36, %v62
    %65 = vset.pattern.permute.xlu0 5
    %66 = vperm.xlu0 %65, %v58
    %v67 = vpop.permute.xlu0 %66
    %v69 = vsub.f32 %v38, %v67
    %vm70 = vcmask 130048
    %v71 = vsel %vm70, %v64, 0.0
    %72 = vadd.xlane.f32.xlu0 %v71
    %v73 = vpop.xlane.xlu0 %72
    %v74 = vadd.f32 %v58, %v73
    %vm75 = vcmask 7168
    %76 = vst.msk [vmem:[#allocation7] sm:$0xff] %vm75, %v74
    %v77 = vld [vmem:[#allocation7] sm:$0xff]
    %v78 = vmul.f32 %v64, %v64
    %v79 = vsel %vm70, %v78, 0.0
    %80 = vadd.xlane.f32.xlu0 %v79
    %v81 = vpop.xlane.xlu0 %80
    %v82 = vadd.f32 %v77, %v81
    %vm83 = vcmask 15368
    %84 = vst.msk [vmem:[#allocation7] sm:$0xff] %vm83, %v82
    %v85 = vld [vmem:[#allocation7] sm:$0xff]
    %v86 = vsel %vm70, %v69, 0.0
    %87 = vadd.xlane.f32.xlu0 %v86
    %v88 = vpop.xlane.xlu0 %87
    %v89 = vadd.f32 %v85, %v88
    %vm90 = vcmask 23568
    %91 = vst.msk [vmem:[#allocation7] sm:$0xff] %vm90, %v89
    %v92 = vld [vmem:[#allocation7] sm:$0xff]
    %v93 = vmul.f32 %v69, %v69
    %v94 = vsel %vm70, %v93, 0.0
    %95 = vadd.xlane.f32.xlu0 %v94
    %v96 = vpop.xlane.xlu0 %95
    %v97 = vadd.f32 %v92, %v96
    %vm98 = vcmask 31768
    %99 = vst.msk [vmem:[#allocation7] sm:$0xff] %vm98, %v97
    // Predicated region
    $region22: #{tpu_custom_call.1} parent=1 // pred_check
      _
    $region23: #{tpu_custom_call.1} parent=1 // pred_check_branch
      %101 = sbr.rel (0) target = $region25
    $region24: #{tpu_custom_call.1} parent=1 // pred_region
      %s103 = ssub.s32 128, 128
      %104 = vsyncadd [#allocation4], %s103
      %s106 = sshll.u32 [#allocation7], 4
      %s107 = int_to_ptr.vmem [resolvable:$true] %s106
      %109 = dma.vmem_to_hbm [thread:$0]  %s107, 128, %s2, [#allocation4]
    $region25: #{tpu_custom_call.1} parent=1 // pred_fallthru
      _
    // Predicated region
    $region26: #{tpu_custom_call.1} parent=1 // pred_check
      _
    $region27: #{tpu_custom_call.1} parent=1 // pred_check_branch
      %111 = sbr.rel (0) target = $region29
    $region28: #{tpu_custom_call.1} parent=1 // pred_region
      %112 = dma.done [#allocation4], 128
    $region29: #{tpu_custom_call.1} parent=1 // pred_fallthru
      _
    %113 = vsyncpa [#allocation3], 1
    %114 = vsyncpa [#allocation6], 1
    %115 = vsyncpa [#allocation4], 1

</llo_original>
